<compile_context>
chip_gen: v7x
topology: tpu7x:2x2x1
jax: 0.10.0
libtpu: 0.0.40
codegen_flags: <defaults>
</compile_context>

<pallas_src>
import functools

import jax
import jax.numpy as jnp
from jax.experimental import pallas as pl
from jax.experimental.pallas import tpu as pltpu


_MAX_H_TILE = 8192            # lanes per H tile (f32 -> 32 KiB contiguous DMA runs)
_MAX_BLOCK_BYTES = 8 << 20    # target per-(B, G, H_tile) output block (2 buffers = 16 MiB)
_HARD_BLOCK_BYTES = 16 << 20  # absolute cap; above this fall back to XLA gather


def _sublane_multiple(itemsize):
    # f32 -> 8, bf16 -> 16, int8/fp8 -> 32: keeps the output writeback sublane-dense.
    return max(8, 32 // max(int(itemsize), 1))


def _choose_h_tile(H):
    """Full H if small or not 128-divisible, else the widest 128-multiple tile."""
    if H <= _MAX_H_TILE or H % 128 != 0:
        return H
    for t in range(_MAX_H_TILE, 127, -128):
        if H % t == 0:
            return t
    return H


def _choose_group(K, B, H_tile, itemsize):
    """Selected rows gathered per grid step.

    Multiple of the sublane granularity (dense writeback), doubled while
      (a) the unrolled DMA-issue loop stays short (<= 64 descriptors/step),
      (b) the block stays under the per-block byte budget, and
      (c) at least two groups remain on the leading grid axis (v7x megacore).
    For K below the sublane granularity the block spans the full K axis.
    """
    sub = _sublane_multiple(itemsize)
    if K <= sub:
        return K
    row_bytes = B * H_tile * itemsize
    G = sub
    while (2 * G <= 64
           and 2 * G * row_bytes <= _MAX_BLOCK_BYTES
           and pl.cdiv(K, 2 * G) >= 2):
        G *= 2
    return G


def _index_select_kernel(idx_ref, x_hbm, o_ref, sem, *, G, H_tile, K):
    """Gather G rows (all batches at once) from HBM directly into the output block."""
    g = pl.program_id(0)          # which group of G output rows
    h = pl.program_id(1)          # which H tile
    base = g * G
    h_start = h * H_tile

    # Issue all G strided gather DMAs (shared semaphore, kept in flight together).
    # All SMEM index reads and .start() calls happen before the first .wait().
    copies = []
    for j in range(G):            # static unroll; G is a small compile-time const
        # Clamp into [0, K-1]: rows past K only exist in the ragged last block
        # and their out-of-bounds output rows are dropped by Pallas on writeback.
        row = idx_ref[jnp.minimum(base + j, K - 1)]
        cp = pltpu.make_async_copy(
            x_hbm.at[:, pl.ds(row, 1), pl.ds(h_start, H_tile)],   # (B, 1, H_tile) in HBM
            o_ref.at[:, pl.ds(j, 1), :],                          # straight into the output block
            sem,
        )
        cp.start()
        copies.append(cp)
    for cp in copies:             # G equal-size waits on the shared semaphore
        cp.wait()


def index_select_axis1(inputs, indices):
    """torch.index_select(inputs, 1, indices) for inputs of shape (B, S, H)."""
    B, S, H = inputs.shape
    idx = jnp.clip(jnp.asarray(indices, dtype=jnp.int32), 0, S - 1)
    K = int(idx.shape[0])
    itemsize = jnp.dtype(inputs.dtype).itemsize

    H_tile = _choose_h_tile(H)
    G = _choose_group(K, B, H_tile, itemsize)
    block_bytes = B * G * H_tile * itemsize
    if block_bytes > _HARD_BLOCK_BYTES:
        # e.g. huge H that is not a multiple of 128: keep VMEM bounded, use XLA gather.
        return jnp.take(inputs, idx, axis=1)

    n_groups = pl.cdiv(K, G)      # last group may be ragged; handled in-kernel
    n_htiles = H // H_tile

    grid_spec = pltpu.PrefetchScalarGridSpec(
        num_scalar_prefetch=1,
        grid=(n_groups, n_htiles),
        in_specs=[
            # Raw HBM ref: the gather is done with manual async copies.
            pl.BlockSpec(memory_space=pl.ANY),
        ],
        out_specs=pl.BlockSpec((B, G, H_tile), lambda g, h, idx_ref: (0, g, h)),
        scratch_shapes=[
            pltpu.SemaphoreType.DMA(()),   # one shared DMA semaphore for all G copies
        ],
    )

    kernel = functools.partial(_index_select_kernel, G=G, H_tile=H_tile, K=K)

    return pl.pallas_call(
        kernel,
        grid_spec=grid_spec,
        out_shape=jax.ShapeDtypeStruct((B, K, H), inputs.dtype),
        compiler_params=pltpu.CompilerParams(
            # Every output block is written exactly once -> both axes independent;
            # lets v7x's 2 TensorCores split the work even when B == 1.
            dimension_semantics=("parallel", "parallel"),
            # Budget derived from the block size (2 output buffers + slack);
            # stays under v7x's 64 MiB physical VMEM, raises v5e's 16 MiB default.
            vmem_limit_bytes=int(min(max(4 * block_bytes, 16 * 1024 ** 2),
                                     48 * 1024 ** 2)),
        ),
        # Pure data movement: tell XLA this call is memory-bound.
        cost_estimate=pl.CostEstimate(
            flops=0,
            transcendentals=0,
            bytes_accessed=int(2 * B * K * H * itemsize),
        ),
    )(idx, inputs)


class IndexSelectLayer:
    """JAX/Pallas equivalent of the PyTorch IndexSelectLayer.

    NOTE: out-of-range indices are clamped to [0, S-1] on the Pallas path
    (torch.index_select would raise); callers should pass valid indices.
    """

    def __init__(self, indices, min_pallas_bytes=1 << 20):
        self.indices = jnp.asarray(indices, dtype=jnp.int32)
        # Below this output size, XLA's native gather beats kernel launch cost.
        self.min_pallas_bytes = min_pallas_bytes

    def __call__(self, inputs, axis=1):
        K = self.indices.shape[0]
        out_bytes = (inputs.size // inputs.shape[axis]) * K * \
            jnp.dtype(inputs.dtype).itemsize
        if inputs.ndim != 3 or out_bytes < self.min_pallas_bytes:
            # Tiny problem or non-3D input: plain XLA gather.
            return jnp.take(inputs, self.indices, axis=axis)
        # NOTE: axis != 1 materializes a transpose in HBM before/after the gather;
        # the hot path for sequential models is axis == 1.
        x = inputs if axis == 1 else jnp.moveaxis(inputs, axis, 1)
        out = index_select_axis1(x, self.indices)
        return out if axis == 1 else jnp.moveaxis(out, 1, axis)


if __name__ == "__main__":
    key = jax.random.PRNGKey(0)
    k1, k2 = jax.random.split(key)

    # Case 1: small (batch, seq, hidden) tensor, kernel called directly.
    # K=5 < 8 exercises the "block spans the full K axis" path.
    B, S, H = 2, 8, 128
    x = jax.random.normal(k1, (B, S, H), dtype=jnp.float32)
    indices = jnp.array([3, 0, 7, 2, 2], dtype=jnp.int32)   # repeats + out-of-order

    out = jax.block_until_ready(index_select_axis1(x, indices))
    ref = jnp.take(x, indices, axis=1)                      # torch.index_select semantics
    assert out.shape == (B, indices.shape[0], H)
    assert out.dtype == x.dtype
    assert jnp.array_equal(out, ref)

    # Case 2: K=20 with G=16 exercises the ragged last group (no pad / post-slice)
    # and the layer dispatch path.
    B2, S2, H2 = 2, 64, 256
    x2 = jax.random.normal(k2, (B2, S2, H2), dtype=jnp.float32)
    idx2 = jax.random.randint(jax.random.PRNGKey(1), (20,), 0, S2, dtype=jnp.int32)
    layer = IndexSelectLayer(idx2, min_pallas_bytes=0)      # force the Pallas path
    out2 = jax.block_until_ready(layer(x2, axis=1))
    assert jnp.array_equal(out2, jnp.take(x2, idx2, axis=1))

    print("KERNEL_OK")
</pallas_src>

<mosaic_0001>
module attributes {stable_mosaic.version = 11 : i64} {
  func.func @_index_select_kernel(%arg0: i32, %arg1: i32, %arg2: memref<5xi32, #tpu.memory_space<smem>>, %arg3: memref<2x8x128xf32, #tpu.memory_space<any>>, %arg4: memref<2x5x128xf32, #tpu.memory_space<vmem>>, %arg5: memref<!tpu.dma_semaphore, #tpu.memory_space<semaphore_mem>>) attributes {dimension_semantics = [#tpu.dimension_semantics<parallel>, #tpu.dimension_semantics<parallel>], iteration_bounds = array<i64: 1, 1>, scalar_prefetch = 1 : i64, scratch_operands = 1 : i64, tpu.core_type = #tpu.core_type<tc>, window_params = [{}, {transform_indices = @transform_1, window_bounds = array<i64: 2, 5, 128>}]} {
    %c5_i32 = arith.constant 5 : i32
    %0 = arith.muli %arg0, %c5_i32 : i32
    %c128_i32 = arith.constant 128 : i32
    %1 = arith.muli %arg1, %c128_i32 : i32
    %c0_i32 = arith.constant 0 : i32
    %2 = arith.addi %0, %c0_i32 : i32
    %c4_i32 = arith.constant 4 : i32
    %3 = arith.minsi %2, %c4_i32 : i32
    %4 = arith.index_cast %3 : i32 to index
    %5 = memref.load %arg2[%4] : memref<5xi32, #tpu.memory_space<smem>>
    %c0_i32_0 = arith.constant 0 : i32
    %6 = tpu.memref_slice %arg3[%c0_i32_0, %5, %1] : memref<2x8x128xf32, #tpu.memory_space<any>> -> memref<2x1x128xf32, #tpu.memory_space<any>>
    %c0_i32_1 = arith.constant 0 : i32
    %c0_i32_2 = arith.constant 0 : i32
    %c0_i32_3 = arith.constant 0 : i32
    %7 = tpu.memref_slice %arg4[%c0_i32_1, %c0_i32_2, %c0_i32_3] : memref<2x5x128xf32, #tpu.memory_space<vmem>> -> memref<2x1x128xf32, #tpu.memory_space<vmem>>
    tpu.enqueue_dma source(%6 : memref<2x1x128xf32, #tpu.memory_space<any>>) target(%7 : memref<2x1x128xf32, #tpu.memory_space<vmem>>) target_semaphore(%arg5 : memref<!tpu.dma_semaphore, #tpu.memory_space<semaphore_mem>>)
    %c1_i32 = arith.constant 1 : i32
    %8 = arith.addi %0, %c1_i32 : i32
    %c4_i32_4 = arith.constant 4 : i32
    %9 = arith.minsi %8, %c4_i32_4 : i32
    %10 = arith.index_cast %9 : i32 to index
    %11 = memref.load %arg2[%10] : memref<5xi32, #tpu.memory_space<smem>>
    %c0_i32_5 = arith.constant 0 : i32
    %12 = tpu.memref_slice %arg3[%c0_i32_5, %11, %1] : memref<2x8x128xf32, #tpu.memory_space<any>> -> memref<2x1x128xf32, #tpu.memory_space<any>>
    %c0_i32_6 = arith.constant 0 : i32
    %c1_i32_7 = arith.constant 1 : i32
    %c0_i32_8 = arith.constant 0 : i32
    %13 = tpu.memref_slice %arg4[%c0_i32_6, %c1_i32_7, %c0_i32_8] : memref<2x5x128xf32, #tpu.memory_space<vmem>> -> memref<2x1x128xf32, #tpu.memory_space<vmem>>
    tpu.enqueue_dma source(%12 : memref<2x1x128xf32, #tpu.memory_space<any>>) target(%13 : memref<2x1x128xf32, #tpu.memory_space<vmem>>) target_semaphore(%arg5 : memref<!tpu.dma_semaphore, #tpu.memory_space<semaphore_mem>>)
    %c2_i32 = arith.constant 2 : i32
    %14 = arith.addi %0, %c2_i32 : i32
    %c4_i32_9 = arith.constant 4 : i32
    %15 = arith.minsi %14, %c4_i32_9 : i32
    %16 = arith.index_cast %15 : i32 to index
    %17 = memref.load %arg2[%16] : memref<5xi32, #tpu.memory_space<smem>>
    %c0_i32_10 = arith.constant 0 : i32
    %18 = tpu.memref_slice %arg3[%c0_i32_10, %17, %1] : memref<2x8x128xf32, #tpu.memory_space<any>> -> memref<2x1x128xf32, #tpu.memory_space<any>>
    %c0_i32_11 = arith.constant 0 : i32
    %c2_i32_12 = arith.constant 2 : i32
    %c0_i32_13 = arith.constant 0 : i32
    %19 = tpu.memref_slice %arg4[%c0_i32_11, %c2_i32_12, %c0_i32_13] : memref<2x5x128xf32, #tpu.memory_space<vmem>> -> memref<2x1x128xf32, #tpu.memory_space<vmem>>
    tpu.enqueue_dma source(%18 : memref<2x1x128xf32, #tpu.memory_space<any>>) target(%19 : memref<2x1x128xf32, #tpu.memory_space<vmem>>) target_semaphore(%arg5 : memref<!tpu.dma_semaphore, #tpu.memory_space<semaphore_mem>>)
    %c3_i32 = arith.constant 3 : i32
    %20 = arith.addi %0, %c3_i32 : i32
    %c4_i32_14 = arith.constant 4 : i32
    %21 = arith.minsi %20, %c4_i32_14 : i32
    %22 = arith.index_cast %21 : i32 to index
    %23 = memref.load %arg2[%22] : memref<5xi32, #tpu.memory_space<smem>>
    %c0_i32_15 = arith.constant 0 : i32
    %24 = tpu.memref_slice %arg3[%c0_i32_15, %23, %1] : memref<2x8x128xf32, #tpu.memory_space<any>> -> memref<2x1x128xf32, #tpu.memory_space<any>>
    %c0_i32_16 = arith.constant 0 : i32
    %c3_i32_17 = arith.constant 3 : i32
    %c0_i32_18 = arith.constant 0 : i32
    %25 = tpu.memref_slice %arg4[%c0_i32_16, %c3_i32_17, %c0_i32_18] : memref<2x5x128xf32, #tpu.memory_space<vmem>> -> memref<2x1x128xf32, #tpu.memory_space<vmem>>
    tpu.enqueue_dma source(%24 : memref<2x1x128xf32, #tpu.memory_space<any>>) target(%25 : memref<2x1x128xf32, #tpu.memory_space<vmem>>) target_semaphore(%arg5 : memref<!tpu.dma_semaphore, #tpu.memory_space<semaphore_mem>>)
    %c4_i32_19 = arith.constant 4 : i32
    %26 = arith.addi %0, %c4_i32_19 : i32
    %c4_i32_20 = arith.constant 4 : i32
    %27 = arith.minsi %26, %c4_i32_20 : i32
    %28 = arith.index_cast %27 : i32 to index
    %29 = memref.load %arg2[%28] : memref<5xi32, #tpu.memory_space<smem>>
    %c0_i32_21 = arith.constant 0 : i32
    %30 = tpu.memref_slice %arg3[%c0_i32_21, %29, %1] : memref<2x8x128xf32, #tpu.memory_space<any>> -> memref<2x1x128xf32, #tpu.memory_space<any>>
    %c0_i32_22 = arith.constant 0 : i32
    %c4_i32_23 = arith.constant 4 : i32
    %c0_i32_24 = arith.constant 0 : i32
    %31 = tpu.memref_slice %arg4[%c0_i32_22, %c4_i32_23, %c0_i32_24] : memref<2x5x128xf32, #tpu.memory_space<vmem>> -> memref<2x1x128xf32, #tpu.memory_space<vmem>>
    tpu.enqueue_dma source(%30 : memref<2x1x128xf32, #tpu.memory_space<any>>) target(%31 : memref<2x1x128xf32, #tpu.memory_space<vmem>>) target_semaphore(%arg5 : memref<!tpu.dma_semaphore, #tpu.memory_space<semaphore_mem>>)
    %c0_i32_25 = arith.constant 0 : i32
    %32 = tpu.memref_slice %arg3[%c0_i32_25, %5, %1] : memref<2x8x128xf32, #tpu.memory_space<any>> -> memref<2x1x128xf32, #tpu.memory_space<any>>
    %c0_i32_26 = arith.constant 0 : i32
    %c0_i32_27 = arith.constant 0 : i32
    %c0_i32_28 = arith.constant 0 : i32
    %33 = tpu.memref_slice %arg4[%c0_i32_26, %c0_i32_27, %c0_i32_28] : memref<2x5x128xf32, #tpu.memory_space<vmem>> -> memref<2x1x128xf32, #tpu.memory_space<vmem>>
    tpu.wait_dma2 semaphore(%arg5 : memref<!tpu.dma_semaphore, #tpu.memory_space<semaphore_mem>>) src(%32 : memref<2x1x128xf32, #tpu.memory_space<any>>) dst(%33 : memref<2x1x128xf32, #tpu.memory_space<vmem>>)
    %c0_i32_29 = arith.constant 0 : i32
    %34 = tpu.memref_slice %arg3[%c0_i32_29, %11, %1] : memref<2x8x128xf32, #tpu.memory_space<any>> -> memref<2x1x128xf32, #tpu.memory_space<any>>
    %c0_i32_30 = arith.constant 0 : i32
    %c1_i32_31 = arith.constant 1 : i32
    %c0_i32_32 = arith.constant 0 : i32
    %35 = tpu.memref_slice %arg4[%c0_i32_30, %c1_i32_31, %c0_i32_32] : memref<2x5x128xf32, #tpu.memory_space<vmem>> -> memref<2x1x128xf32, #tpu.memory_space<vmem>>
    tpu.wait_dma2 semaphore(%arg5 : memref<!tpu.dma_semaphore, #tpu.memory_space<semaphore_mem>>) src(%34 : memref<2x1x128xf32, #tpu.memory_space<any>>) dst(%35 : memref<2x1x128xf32, #tpu.memory_space<vmem>>)
    %c0_i32_33 = arith.constant 0 : i32
    %36 = tpu.memref_slice %arg3[%c0_i32_33, %17, %1] : memref<2x8x128xf32, #tpu.memory_space<any>> -> memref<2x1x128xf32, #tpu.memory_space<any>>
    %c0_i32_34 = arith.constant 0 : i32
    %c2_i32_35 = arith.constant 2 : i32
    %c0_i32_36 = arith.constant 0 : i32
    %37 = tpu.memref_slice %arg4[%c0_i32_34, %c2_i32_35, %c0_i32_36] : memref<2x5x128xf32, #tpu.memory_space<vmem>> -> memref<2x1x128xf32, #tpu.memory_space<vmem>>
    tpu.wait_dma2 semaphore(%arg5 : memref<!tpu.dma_semaphore, #tpu.memory_space<semaphore_mem>>) src(%36 : memref<2x1x128xf32, #tpu.memory_space<any>>) dst(%37 : memref<2x1x128xf32, #tpu.memory_space<vmem>>)
    %c0_i32_37 = arith.constant 0 : i32
    %38 = tpu.memref_slice %arg3[%c0_i32_37, %23, %1] : memref<2x8x128xf32, #tpu.memory_space<any>> -> memref<2x1x128xf32, #tpu.memory_space<any>>
    %c0_i32_38 = arith.constant 0 : i32
    %c3_i32_39 = arith.constant 3 : i32
    %c0_i32_40 = arith.constant 0 : i32
    %39 = tpu.memref_slice %arg4[%c0_i32_38, %c3_i32_39, %c0_i32_40] : memref<2x5x128xf32, #tpu.memory_space<vmem>> -> memref<2x1x128xf32, #tpu.memory_space<vmem>>
    tpu.wait_dma2 semaphore(%arg5 : memref<!tpu.dma_semaphore, #tpu.memory_space<semaphore_mem>>) src(%38 : memref<2x1x128xf32, #tpu.memory_space<any>>) dst(%39 : memref<2x1x128xf32, #tpu.memory_space<vmem>>)
    %c0_i32_41 = arith.constant 0 : i32
    %40 = tpu.memref_slice %arg3[%c0_i32_41, %29, %1] : memref<2x8x128xf32, #tpu.memory_space<any>> -> memref<2x1x128xf32, #tpu.memory_space<any>>
    %c0_i32_42 = arith.constant 0 : i32
    %c4_i32_43 = arith.constant 4 : i32
    %c0_i32_44 = arith.constant 0 : i32
    %41 = tpu.memref_slice %arg4[%c0_i32_42, %c4_i32_43, %c0_i32_44] : memref<2x5x128xf32, #tpu.memory_space<vmem>> -> memref<2x1x128xf32, #tpu.memory_space<vmem>>
    tpu.wait_dma2 semaphore(%arg5 : memref<!tpu.dma_semaphore, #tpu.memory_space<semaphore_mem>>) src(%40 : memref<2x1x128xf32, #tpu.memory_space<any>>) dst(%41 : memref<2x1x128xf32, #tpu.memory_space<vmem>>)
    return
  }
  func.func @transform_1(%arg0: i32, %arg1: i32, %arg2: memref<5xi32, #tpu.memory_space<smem>>) -> (i32, i32, i32) {
    %c0_i32 = arith.constant 0 : i32
    %c0_i32_0 = arith.constant 0 : i32
    return %c0_i32, %arg0, %arg1 : i32, i32, i32
  }
}

</mosaic_0001>

<llo_original>
// kernel: tpu_custom_call.1
$region0: #{tpu_custom_call.1}
  #allocation0 [shape = 'u32[]', space=smem, size = 0x4, offset = 0x4, fixed_abs, tag = 'smem constant byte address 0x4 - core index']
  #allocation1 [shape = 'u32[144,128]{1,0:T(1,128)}', space=vmem, size = 0x12000, scoped, tag = 'internal scratch']
  #allocation2 [shape = 's32[1]{0}', space=sflag, size = 0x4, scoped, tag = 'scratch operand']
  #allocation3 [shape = 's32[1]{0}', space=sflag, size = 0x4, scoped, tag = 'scoped memory for tpu_custom_call.1']
  #allocation4 [shape = 'u8[512]{0}', space=smem, size = 0x200, scoped, tag = 'prefetched SMEM operand 0']
  #allocation5 [shape = 's32[]', space=sflag, size = 0x4, offset = 0, fixed_abs, tag = 'sflag constant byte address 0x0 - dummy sync flag']
  #allocation6 [shape = 's32[]', space=sflag, size = 0x4, offset = 0, fixed_abs, tag = 'sflag constant byte address 0x0 - dummy sync flag']
  #allocation7 [shape = 's32[]', space=sflag, size = 0x4, offset = 0, fixed_abs, tag = 'sflag constant byte address 0x0 - dummy sync flag']
  #allocation8 [shape = 's32[]', space=sflag, size = 0x4, offset = 0, fixed_abs, tag = 'sflag constant byte address 0x0 - dummy sync flag']
  #allocation9 [shape = 's32[]', space=sflag, size = 0x4, offset = 0, fixed_abs, tag = 'sflag constant byte address 0x0 - dummy sync flag']
  %s0 = inlined_call_operand.hbm [shape: s32[5], index: 0, kind: input, shape index: {}]
  %s1 = inlined_call_operand.hbm [shape: f32[2,8,128], index: 1, kind: input, shape index: {}]
  %s2 = inlined_call_operand.vmem [shape: f32[2,5,128], index: 2, kind: output, shape index: {}]
  %s3 = sld [smem:[#allocation0]]
  $region10: #{tpu_custom_call.1} parent=0
    _
  %s5 = ssub.s32 1, %s3
  %s6 = scalar_select 0, %s5, %s3
  %8 = dma.hbm_to_smem %s0, 16, [#allocation4], [#allocation3]
  %9 = dma.done [#allocation3], 16
  %10 = sfence
  %s11 = smul.u32 0, 5
  %s12 = smul.u32 0, 128
  %p13 = scmp.lt.s32.totalorder %s11, 4
  %s14 = scalar_select %p13, %s11, 4
  %s15 = sld [smem:[#allocation4 + %s14]]
  %s16 = sshra.s32 %s12, 7
  %s17 = sand.u32 %s12, 127
  %s18 = sadd.s32 %s16, %s15
  %s19 = smul.addr %s18, 16
  %s20 = scalar_lea.hbm %s1, %s19
  %s22 = sshll.u32 %s2, 4
  %s23 = int_to_ptr.vmem [resolvable:$true] %s22
  %25 = dma.hbm_to_vmem [thread:$0]  %s20, 32, %s23, [#allocation2], 128, 128, 1
  %s26 = sadd.s32 %s11, 1
  %p27 = scmp.lt.s32.totalorder %s26, 4
  %s28 = scalar_select %p27, %s26, 4
  %s29 = sld [smem:[#allocation4 + %s28]]
  %s30 = sadd.s32 %s16, %s29
  %s31 = smul.addr %s30, 16
  %s32 = scalar_lea.hbm %s1, %s31
  %s33 = scalar_lea.vmem %s2, 1
  %s35 = sshll.u32 %s33, 4
  %s36 = int_to_ptr.vmem [resolvable:$true] %s35
  %38 = dma.hbm_to_vmem [thread:$0]  %s32, 32, %s36, [#allocation2], 128, 128, 1
  %s39 = sadd.s32 %s11, 2
  %p40 = scmp.lt.s32.totalorder %s39, 4
  %s41 = scalar_select %p40, %s39, 4
  %s42 = sld [smem:[#allocation4 + %s41]]
  %s43 = sadd.s32 %s16, %s42
  %s44 = smul.addr %s43, 16
  %s45 = scalar_lea.hbm %s1, %s44
  %s46 = scalar_lea.vmem %s2, 2
  %s48 = sshll.u32 %s46, 4
  %s49 = int_to_ptr.vmem [resolvable:$true] %s48
  %51 = dma.hbm_to_vmem [thread:$0]  %s45, 32, %s49, [#allocation2], 128, 128, 1
  %s52 = sadd.s32 %s11, 3
  %p53 = scmp.lt.s32.totalorder %s52, 4
  %s54 = scalar_select %p53, %s52, 4
  %s55 = sld [smem:[#allocation4 + %s54]]
  %s56 = sadd.s32 %s16, %s55
  %s57 = smul.addr %s56, 16
  %s58 = scalar_lea.hbm %s1, %s57
  %s59 = scalar_lea.vmem %s2, 3
  %s61 = sshll.u32 %s59, 4
  %s62 = int_to_ptr.vmem [resolvable:$true] %s61
  %64 = dma.hbm_to_vmem [thread:$0]  %s58, 32, %s62, [#allocation2], 128, 128, 1
  %s65 = sadd.s32 %s11, 4
  %p66 = scmp.lt.s32.totalorder %s65, 4
  %s67 = scalar_select %p66, %s65, 4
  %s68 = sld [smem:[#allocation4 + %s67]]
  %s69 = sadd.s32 %s16, %s68
  %s70 = smul.addr %s69, 16
  %s71 = scalar_lea.hbm %s1, %s70
  %s72 = scalar_lea.vmem %s2, 4
  %s74 = sshll.u32 %s72, 4
  %s75 = int_to_ptr.vmem [resolvable:$true] %s74
  %77 = dma.hbm_to_vmem [thread:$0]  %s71, 32, %s75, [#allocation2], 128, 128, 1
  %s78 = smul.u32 2, 1
  %s79 = smul.u32 %s78, 1
  %s80 = sshll.u32 %s79, 4
  %81 = dma.done [#allocation2], %s80
  %s82 = sshll.u32 %s79, 4
  %83 = dma.done [#allocation2], %s82
  %s84 = sshll.u32 %s79, 4
  %85 = dma.done [#allocation2], %s84
  %s86 = sshll.u32 %s79, 4
  %87 = dma.done [#allocation2], %s86
  %s88 = sshll.u32 %s79, 4
  %89 = dma.done [#allocation2], %s88
  // Predicated region
  $region2: #{tpu_custom_call.1} parent=0 // pred_check
    _
  $region3: #{tpu_custom_call.1} parent=0 // pred_check_branch
    %91 = sbr.rel (0) target = $region5
  $region4: #{tpu_custom_call.1} parent=0 // pred_region
    _
  $region5: #{tpu_custom_call.1} parent=0 // pred_fallthru
    _
  // Predicated region
  $region6: #{tpu_custom_call.1} parent=0 // pred_check
    _
  $region7: #{tpu_custom_call.1} parent=0 // pred_check_branch
    %93 = sbr.rel (0) target = $region9
  $region8: #{tpu_custom_call.1} parent=0 // pred_region
    _
  $region9: #{tpu_custom_call.1} parent=0 // pred_fallthru
    _
  %94 = vsyncmov [#allocation2]
  %s95 = vpop.sfrf %94
  %p96 = scmp.eq.s32.totalorder %s95, 0
  %p97 = pneg %p96
  %99 = shalt.err (%p97)

</llo_original>
